<compile_context>
chip_gen: v7x
topology: tpu7x:2x2x1
jax: 0.10.0
libtpu: 0.0.40
codegen_flags: <defaults>
</compile_context>

<pallas_src>
import jax
import jax.numpy as jnp
from jax.experimental import pallas as pl
from jax.experimental.pallas import tpu as pltpu

IN_FEATURES = 28 * 28   # 784
HIDDEN = 128
NUM_CLASSES = 10

MAX_TILE_B = 2048             # multiple of 256; ~13 MiB double-buffered worst case (f32 x)
SINGLE_STEP_MAX_B = 512       # below this, one full-batch block (dim == array dim, always legal)
SMALL_BATCH_XLA_B = 32        # below this, plain XLA beats pallas launch + weight DMA


def _round_up(x, m):
    return (x + m - 1) // m * m


def _cdiv(a, b):
    return (a + b - 1) // b


def _choose_tile_b(B):
    """Pick the batch tile.

    - tiny/medium B: a single block equal to the full batch dim (exempt from the
      (8, 128) divisibility rule, no padding, one grid step).
    - large B: big tiles (multiple of 256 for the MXU M dim) but always >= 2 grid
      steps so the 'parallel' axis can shard across v7x's 2 TensorCores.
    """
    if B <= SINGLE_STEP_MAX_B:
        return B
    return min(MAX_TILE_B, _round_up(_cdiv(B, 2), 256))


def mnist_mlp_kernel(x_ref, w1_ref, b1_ref, w2_ref, b2_ref, o_ref):
    # x_ref:  (TILE_B, 784) native dtype (f32 / bf16 / integer pixels)
    # w1_ref: (784, 128) bf16   b1_ref: (1, 128) f32
    # w2_ref: (128, 10)  bf16   b2_ref: (1, 10)  f32
    # o_ref:  (TILE_B, 10) f32
    #
    # Cast x to bf16 on the VPU here (free: VALU slots are far from saturated),
    # instead of a separate, unfused XLA cast that would re-read/write x in HBM.
    x = x_ref[...].astype(jnp.bfloat16)

    # linear1 + relu: bf16 MXU matmul, f32 accumulation
    h = jnp.dot(x, w1_ref[...], preferred_element_type=jnp.float32) + b1_ref[...]
    h = jnp.maximum(h, 0.0)

    # linear2: tiny (K=128, N=10) -> keep h in f32, upcast w2 in-kernel (no extra
    # rounding of h; cost is negligible next to the 784x128 matmul).
    logits = jnp.dot(h, w2_ref[...].astype(jnp.float32),
                     preferred_element_type=jnp.float32) + b2_ref[...]

    # numerically stable softmax over classes; exact divide (kernel is HBM-bound,
    # approx reciprocal gains nothing and leaves rows only ~5e-3 normalized).
    m = jnp.max(logits, axis=1, keepdims=True)
    e = jnp.exp(logits - m)
    o_ref[...] = (e / jnp.sum(e, axis=1, keepdims=True)).astype(o_ref.dtype)


def prepare_params(w1, b1, w2, b2):
    """One-time parameter prep (call OUTSIDE the per-step jit): cast weights to bf16
    and reshape biases.  w1: (784, 128), b1: (128,), w2: (128, 10), b2: (10,)."""
    return (w1.astype(jnp.bfloat16),
            b1.reshape(1, HIDDEN).astype(jnp.float32),
            w2.astype(jnp.bfloat16),
            b2.reshape(1, NUM_CLASSES).astype(jnp.float32))


@jax.jit
def mnist_forward_pallas(x, w1_bf16, b1, w2_bf16, b2):
    """x: (B, 1, 28, 28) or (B, 784), any float/int dtype. Returns (B, 10) f32 probs."""
    x2 = x.reshape(-1, IN_FEATURES)          # metadata-only, like torch .view(-1, 784)
    B = x2.shape[0]

    tile_b = _choose_tile_b(B)
    grid = (_cdiv(B, tile_b),)               # no jnp.pad: partial last block is masked

    cost = pl.CostEstimate(
        flops=2 * B * IN_FEATURES * HIDDEN + 2 * B * HIDDEN * NUM_CLASSES,
        transcendentals=B * NUM_CLASSES,
        bytes_accessed=(x2.size * x2.dtype.itemsize
                        + w1_bf16.size * 2 + w2_bf16.size * 2
                        + b1.size * 4 + b2.size * 4
                        + B * NUM_CLASSES * 4),
    )

    # TODO(synk): for repeated tiny-batch serving, keep weights VMEM-resident across
    # pallas_calls (cross-call semaphore/VMEM-future pattern) instead of re-DMAing
    # the 0.2 MiB of weights every call.
    out = pl.pallas_call(
        mnist_mlp_kernel,
        out_shape=jax.ShapeDtypeStruct((B, NUM_CLASSES), jnp.float32),
        grid=grid,
        in_specs=[
            # x: batch-tiled, software-pipelined stream (native dtype)
            pl.BlockSpec((tile_b, IN_FEATURES), lambda i: (i, 0)),
            # weights / biases: constant index_map -> fetched once, VMEM-resident
            pl.BlockSpec((IN_FEATURES, HIDDEN), lambda i: (0, 0)),
            pl.BlockSpec((1, HIDDEN), lambda i: (0, 0)),
            pl.BlockSpec((HIDDEN, NUM_CLASSES), lambda i: (0, 0)),
            pl.BlockSpec((1, NUM_CLASSES), lambda i: (0, 0)),
        ],
        out_specs=pl.BlockSpec((tile_b, NUM_CLASSES), lambda i: (i, 0)),
        compiler_params=pltpu.CompilerParams(
            dimension_semantics=("parallel",),     # megacore sharding on v7x
            vmem_limit_bytes=32 * 1024 * 1024,     # safe on v5e/v6e and on v7x's 64 MiB part
        ),
        cost_estimate=cost,
    )(x2, w1_bf16, b1, w2_bf16, b2)

    return out


@jax.jit
def _mnist_forward_xla(x, w1_bf16, b1, w2_bf16, b2):
    """Plain-XLA path for tiny serving batches (pallas launch + weight DMA dominate)."""
    x2 = x.reshape(-1, IN_FEATURES).astype(jnp.float32)
    h = jnp.maximum(x2 @ w1_bf16.astype(jnp.float32) + b1, 0.0)
    return jax.nn.softmax(h @ w2_bf16.astype(jnp.float32) + b2, axis=1)


def mnist_forward(x, params):
    """Dispatcher: tiny batches -> XLA, otherwise the Pallas kernel."""
    B = x.reshape(-1, IN_FEATURES).shape[0]
    if B <= SMALL_BATCH_XLA_B:
        return _mnist_forward_xla(x, *params)
    return mnist_forward_pallas(x, *params)


def reference_forward(x, w1, b1, w2, b2):
    """Pure-JAX f32 reference matching the PyTorch module."""
    x2 = x.reshape(-1, IN_FEATURES).astype(jnp.float32)
    h = jnp.maximum(x2 @ w1 + b1, 0.0)
    return jax.nn.softmax(h @ w2 + b2, axis=1)


def init_params(key):
    """Deterministic init mimicking nn.Linear defaults (U(-1/sqrt(fan_in), ...)).
    Weights returned already transposed to (in, out)."""
    k1, k2, k3, k4 = jax.random.split(key, 4)
    bound1 = 1.0 / jnp.sqrt(jnp.float32(IN_FEATURES))
    bound2 = 1.0 / jnp.sqrt(jnp.float32(HIDDEN))
    w1 = jax.random.uniform(k1, (IN_FEATURES, HIDDEN), jnp.float32, -bound1, bound1)
    b1 = jax.random.uniform(k2, (HIDDEN,), jnp.float32, -bound1, bound1)
    w2 = jax.random.uniform(k3, (HIDDEN, NUM_CLASSES), jnp.float32, -bound2, bound2)
    b2 = jax.random.uniform(k4, (NUM_CLASSES,), jnp.float32, -bound2, bound2)
    return w1, b1, w2, b2


def _check(out, ref, B):
    assert out.shape == (B, NUM_CLASSES)
    assert bool(jnp.all(jnp.isfinite(out)))
    assert jnp.allclose(jnp.sum(out, axis=1), 1.0, atol=1e-3)      # exact divide
    assert float(jnp.max(jnp.abs(out - ref))) < 5e-2               # bf16 layer-1 matmul


if __name__ == "__main__":
    key = jax.random.PRNGKey(0)
    kx1, kx2, kp = jax.random.split(key, 3)
    w1, b1, w2, b2 = init_params(kp)
    params = prepare_params(w1, b1, w2, b2)   # bf16 weight cast done ONCE, outside jit

    # 1) tiny batch (single full-batch block), NCHW like PyTorch MNIST
    B1 = 8
    x1 = jax.random.normal(kx1, (B1, 1, 28, 28), jnp.float32)
    out1 = jax.block_until_ready(mnist_forward_pallas(x1, *params))
    _check(out1, reference_forward(x1, w1, b1, w2, b2), B1)

    # 2) batch not divisible by the tile: 2 grid steps, partial (masked) last block
    B2 = 600
    x2 = jax.random.normal(kx2, (B2, 1, 28, 28), jnp.float32)
    out2 = jax.block_until_ready(mnist_forward_pallas(x2, *params))
    _check(out2, reference_forward(x2, w1, b1, w2, b2), B2)

    print("KERNEL_OK")
</pallas_src>

<mosaic_0001>
module attributes {stable_mosaic.version = 11 : i64} {
  func.func @mnist_mlp_kernel(%arg0: i32, %arg1: memref<8x784xf32, #tpu.memory_space<vmem>>, %arg2: memref<784x128xbf16, #tpu.memory_space<vmem>>, %arg3: memref<1x128xf32, #tpu.memory_space<vmem>>, %arg4: memref<128x10xbf16, #tpu.memory_space<vmem>>, %arg5: memref<1x10xf32, #tpu.memory_space<vmem>>, %arg6: memref<8x10xf32, #tpu.memory_space<vmem>>) attributes {dimension_semantics = [#tpu.dimension_semantics<parallel>], iteration_bounds = array<i64: 1>, scalar_prefetch = 0 : i64, scratch_operands = 0 : i64, tpu.core_type = #tpu.core_type<tc>, window_params = [{transform_indices = @transform_0, window_bounds = array<i64: 8, 784>}, {pipeline_mode = #tpu.pipeline_mode<synchronous>, transform_indices = @transform_1, window_bounds = array<i64: 784, 128>}, {pipeline_mode = #tpu.pipeline_mode<synchronous>, transform_indices = @transform_2, window_bounds = array<i64: 1, 128>}, {pipeline_mode = #tpu.pipeline_mode<synchronous>, transform_indices = @transform_3, window_bounds = array<i64: 128, 10>}, {pipeline_mode = #tpu.pipeline_mode<synchronous>, transform_indices = @transform_4, window_bounds = array<i64: 1, 10>}, {transform_indices = @transform_5, window_bounds = array<i64: 8, 10>}]} {
    %c0 = arith.constant 0 : index
    %c0_0 = arith.constant 0 : index
    %0 = vector.load %arg1[%c0, %c0_0] : memref<8x784xf32, #tpu.memory_space<vmem>>, vector<8x784xf32>
    %1 = arith.truncf %0 : vector<8x784xf32> to vector<8x784xbf16>
    %c0_1 = arith.constant 0 : index
    %c0_2 = arith.constant 0 : index
    %2 = vector.load %arg2[%c0_1, %c0_2] : memref<784x128xbf16, #tpu.memory_space<vmem>>, vector<784x128xbf16>
    %cst = arith.constant dense<0.000000e+00> : vector<8x128xf32>
    %3 = tpu.matmul %1, %2, %cst {dimension_numbers = #tpu.dot_dimension_numbers<[1], [0], [0], [1], [0, 0, 1, 1], [], []>} : vector<8x784xbf16>, vector<784x128xbf16>, vector<8x128xf32> -> vector<8x128xf32>
    %c0_3 = arith.constant 0 : index
    %c0_4 = arith.constant 0 : index
    %4 = vector.load %arg3[%c0_3, %c0_4] : memref<1x128xf32, #tpu.memory_space<vmem>>, vector<1x128xf32>
    %5 = vector.broadcast %4 : vector<1x128xf32> to vector<8x128xf32>
    %6 = arith.addf %3, %5 : vector<8x128xf32>
    %cst_5 = arith.constant 0.000000e+00 : f32
    %7 = vector.broadcast %cst_5 : f32 to vector<8x128xf32>
    %8 = arith.maximumf %6, %7 : vector<8x128xf32>
    %c0_6 = arith.constant 0 : index
    %c0_7 = arith.constant 0 : index
    %9 = vector.load %arg4[%c0_6, %c0_7] : memref<128x10xbf16, #tpu.memory_space<vmem>>, vector<128x10xbf16>
    %10 = arith.extf %9 : vector<128x10xbf16> to vector<128x10xf32>
    %cst_8 = arith.constant dense<0.000000e+00> : vector<8x10xf32>
    %11 = tpu.matmul %8, %10, %cst_8 {dimension_numbers = #tpu.dot_dimension_numbers<[1], [0], [0], [1], [0, 0, 1, 1], [], []>} : vector<8x128xf32>, vector<128x10xf32>, vector<8x10xf32> -> vector<8x10xf32>
    %c0_9 = arith.constant 0 : index
    %c0_10 = arith.constant 0 : index
    %12 = vector.load %arg5[%c0_9, %c0_10] : memref<1x10xf32, #tpu.memory_space<vmem>>, vector<1x10xf32>
    %13 = vector.broadcast %12 : vector<1x10xf32> to vector<8x10xf32>
    %14 = arith.addf %11, %13 : vector<8x10xf32>
    %cst_11 = arith.constant dense<0xFF800000> : vector<8xf32>
    %15 = vector.multi_reduction <maximumf>, %14, %cst_11 [1] : vector<8x10xf32> to vector<8xf32>
    %16 = vector.shape_cast %15 : vector<8xf32> to vector<8x1xf32>
    %17 = vector.broadcast %16 : vector<8x1xf32> to vector<8x10xf32>
    %18 = arith.subf %14, %17 : vector<8x10xf32>
    %19 = math.exp %18 : vector<8x10xf32>
    %cst_12 = arith.constant dense<0.000000e+00> : vector<8xf32>
    %20 = vector.multi_reduction <add>, %19, %cst_12 [1] : vector<8x10xf32> to vector<8xf32>
    %21 = vector.shape_cast %20 : vector<8xf32> to vector<8x1xf32>
    %22 = vector.broadcast %21 : vector<8x1xf32> to vector<8x10xf32>
    %23 = arith.divf %19, %22 : vector<8x10xf32>
    %c0_13 = arith.constant 0 : index
    %c0_14 = arith.constant 0 : index
    %24 = vector.load %arg6[%c0_13, %c0_14] : memref<8x10xf32, #tpu.memory_space<vmem>>, vector<8x10xf32>
    tpu.vector_store %arg6[%c0_13, %c0_14], %23 {strides = array<i32>} : memref<8x10xf32, #tpu.memory_space<vmem>>, vector<8x10xf32>,
    return
  }
  func.func @transform_0(%arg0: i32) -> (i32, i32) {
    %c0_i32 = arith.constant 0 : i32
    %c0_i32_0 = arith.constant 0 : i32
    return %arg0, %c0_i32 : i32, i32
  }
  func.func @transform_1(%arg0: i32) -> (i32, i32) {
    %c0_i32 = arith.constant 0 : i32
    %c0_i32_0 = arith.constant 0 : i32
    %c0_i32_1 = arith.constant 0 : i32
    return %c0_i32, %c0_i32_0 : i32, i32
  }
  func.func @transform_2(%arg0: i32) -> (i32, i32) {
    %c0_i32 = arith.constant 0 : i32
    %c0_i32_0 = arith.constant 0 : i32
    %c0_i32_1 = arith.constant 0 : i32
    return %c0_i32, %c0_i32_0 : i32, i32
  }
  func.func @transform_3(%arg0: i32) -> (i32, i32) {
    %c0_i32 = arith.constant 0 : i32
    %c0_i32_0 = arith.constant 0 : i32
    %c0_i32_1 = arith.constant 0 : i32
    return %c0_i32, %c0_i32_0 : i32, i32
  }
  func.func @transform_4(%arg0: i32) -> (i32, i32) {
    %c0_i32 = arith.constant 0 : i32
    %c0_i32_0 = arith.constant 0 : i32
    %c0_i32_1 = arith.constant 0 : i32
    return %c0_i32, %c0_i32_0 : i32, i32
  }
  func.func @transform_5(%arg0: i32) -> (i32, i32) {
    %c0_i32 = arith.constant 0 : i32
    %c0_i32_0 = arith.constant 0 : i32
    return %arg0, %c0_i32 : i32, i32
  }
}

</mosaic_0001>

<llo_original>
// kernel: mnist_forward_pallas.1
$region0: #{mnist_forward_pallas.1}
  #allocation0 [shape = 'u32[]', space=smem, size = 0x4, offset = 0x4, fixed_abs, tag = 'smem constant byte address 0x4 - core index']
  #allocation1 [shape = 'u32[144,128]{1,0:T(1,128)}', space=vmem, size = 0x12000, scoped, tag = 'internal scratch']
  %s0 = inlined_call_operand.vmem [shape: f32[8,784], index: 0, kind: input, shape index: {}]
  %s1 = inlined_call_operand.vmem [shape: bf16[784,128], index: 1, kind: input, shape index: {}]
  %s2 = inlined_call_operand.vmem [shape: f32[1,128], index: 2, kind: input, shape index: {}]
  %s3 = inlined_call_operand.vmem [shape: bf16[128,10], index: 3, kind: input, shape index: {}]
  %s4 = inlined_call_operand.vmem [shape: f32[1,10], index: 4, kind: input, shape index: {}]
  %s5 = inlined_call_operand.hbm [shape: f32[8,10], index: 5, kind: output, shape index: {}]
  %s6 = sld [smem:[#allocation0]]
  $region30: #{mnist_forward_pallas.1} parent=0
    _
  %s8 = ssub.s32 1, %s6
  %s9 = scalar_select 0, %s8, %s6
  $region1: #{mnist_forward_pallas.1} parent=0
    #allocation2 [shape = 'u8[4096]{0}', space=vmem, size = 0x1000, scoped, tag = 'output window, operand 0, single buffered']
    #allocation3 [shape = 's32[1]{0}', space=sflag, size = 0x4, scoped, tag = 'scoped memory for mnist_forward_pallas.1']
    %10 = vsyncpa [#allocation3], 0
    // Predicated region
    $region2: #{mnist_forward_pallas.1} parent=1 // pred_check
      _
    $region3: #{mnist_forward_pallas.1} parent=1 // pred_check_branch
      %12 = sbr.rel (0) target = $region5
    $region4: #{mnist_forward_pallas.1} parent=1 // pred_region
      _
    $region5: #{mnist_forward_pallas.1} parent=1 // pred_fallthru
      _
    // Predicated region
    $region6: #{mnist_forward_pallas.1} parent=1 // pred_check
      _
    $region7: #{mnist_forward_pallas.1} parent=1 // pred_check_branch
      %14 = sbr.rel (0) target = $region9
    $region8: #{mnist_forward_pallas.1} parent=1 // pred_region
      _
    $region9: #{mnist_forward_pallas.1} parent=1 // pred_fallthru
      _
    // Predicated region
    $region10: #{mnist_forward_pallas.1} parent=1 // pred_check
      _
    $region11: #{mnist_forward_pallas.1} parent=1 // pred_check_branch
      %16 = sbr.rel (0) target = $region13
    $region12: #{mnist_forward_pallas.1} parent=1 // pred_region
      _
    $region13: #{mnist_forward_pallas.1} parent=1 // pred_fallthru
      _
    // Predicated region
    $region14: #{mnist_forward_pallas.1} parent=1 // pred_check
      _
    $region15: #{mnist_forward_pallas.1} parent=1 // pred_check_branch
      %18 = sbr.rel (0) target = $region17
    $region16: #{mnist_forward_pallas.1} parent=1 // pred_region
      _
    $region17: #{mnist_forward_pallas.1} parent=1 // pred_fallthru
      _
    // Predicated region
    $region18: #{mnist_forward_pallas.1} parent=1 // pred_check
      _
    $region19: #{mnist_forward_pallas.1} parent=1 // pred_check_branch
      %20 = sbr.rel (0) target = $region21
    $region20: #{mnist_forward_pallas.1} parent=1 // pred_region
      _
    $region21: #{mnist_forward_pallas.1} parent=1 // pred_fallthru
      _
    %v22 = vld [vmem:[%s0] sm:$0xff]
    %v23 = vld [vmem:[%s0 + $0x8] sm:$0xff]
    %v24 = vld [vmem:[%s0 + $0x10] sm:$0xff]
    %v25 = vld [vmem:[%s0 + $0x18] sm:$0xff]
    %v26 = vld [vmem:[%s0 + $0x20] sm:$0xff]
    %v27 = vld [vmem:[%s0 + $0x28] sm:$0xff]
    %v28 = vld [vmem:[%s0 + $0x30] sm:$0xff]
    %v29 = vpack.c.bf16 %v22, %v22
    %v30 = vpack.c.bf16 %v23, %v23
    %v31 = vpack.c.bf16 %v24, %v24
    %v32 = vpack.c.bf16 %v25, %v25
    %v33 = vpack.c.bf16 %v26, %v26
    %v34 = vpack.c.bf16 %v27, %v27
    %v35 = vpack.c.bf16 %v28, %v28
    %v36 = vld [vmem:[%s1] sm:$0xf]
    %v37 = vld [vmem:[%s1 + $0x4] sm:$0xf]
    %v38 = vld [vmem:[%s1 + $0x8] sm:$0xf]
    %v39 = vld [vmem:[%s1 + $0xc] sm:$0xf]
    %v40 = vld [vmem:[%s1 + $0x10] sm:$0xf]
    %v41 = vld [vmem:[%s1 + $0x14] sm:$0xf]
    %v42 = vld [vmem:[%s1 + $0x18] sm:$0xf]
    %v43 = vld [vmem:[%s1 + $0x1c] sm:$0xf]
    %v44 = vld [vmem:[%s1 + $0x20] sm:$0xf]
    %v45 = vld [vmem:[%s1 + $0x24] sm:$0xf]
    %v46 = vld [vmem:[%s1 + $0x28] sm:$0xf]
    %v47 = vld [vmem:[%s1 + $0x2c] sm:$0xf]
    %v48 = vld [vmem:[%s1 + $0x30] sm:$0xf]
    %v49 = vld [vmem:[%s1 + $0x34] sm:$0xf]
    %v50 = vld [vmem:[%s1 + $0x38] sm:$0xf]
    %v51 = vld [vmem:[%s1 + $0x3c] sm:$0xf]
    %v52 = vld [vmem:[%s1 + $0x40] sm:$0xf]
    %v53 = vld [vmem:[%s1 + $0x44] sm:$0xf]
    %v54 = vld [vmem:[%s1 + $0x48] sm:$0xf]
    %v55 = vld [vmem:[%s1 + $0x4c] sm:$0xf]
    %v56 = vld [vmem:[%s1 + $0x50] sm:$0xf]
    %v57 = vld [vmem:[%s1 + $0x54] sm:$0xf]
    %v58 = vld [vmem:[%s1 + $0x58] sm:$0xf]
    %v59 = vld [vmem:[%s1 + $0x5c] sm:$0xf]
    %v60 = vld [vmem:[%s1 + $0x60] sm:$0xf]
    %v61 = vld [vmem:[%s1 + $0x64] sm:$0xf]
    %v62 = vld [vmem:[%s1 + $0x68] sm:$0xf]
    %v63 = vld [vmem:[%s1 + $0x6c] sm:$0xf]
    %v64 = vld [vmem:[%s1 + $0x70] sm:$0xf]
    %v65 = vld [vmem:[%s1 + $0x74] sm:$0xf]
    %v66 = vld [vmem:[%s1 + $0x78] sm:$0xf]
    %v67 = vld [vmem:[%s1 + $0x7c] sm:$0xf]
    %v68 = vld [vmem:[%s1 + $0x80] sm:$0xf]
    %v69 = vld [vmem:[%s1 + $0x84] sm:$0xf]
    %v70 = vld [vmem:[%s1 + $0x88] sm:$0xf]
    %v71 = vld [vmem:[%s1 + $0x8c] sm:$0xf]
    %v72 = vld [vmem:[%s1 + $0x90] sm:$0xf]
    %v73 = vld [vmem:[%s1 + $0x94] sm:$0xf]
    %v74 = vld [vmem:[%s1 + $0x98] sm:$0xf]
    %v75 = vld [vmem:[%s1 + $0x9c] sm:$0xf]
    %v76 = vld [vmem:[%s1 + $0xa0] sm:$0xf]
    %v77 = vld [vmem:[%s1 + $0xa4] sm:$0xf]
    %v78 = vld [vmem:[%s1 + $0xa8] sm:$0xf]
    %v79 = vld [vmem:[%s1 + $0xac] sm:$0xf]
    %v80 = vld [vmem:[%s1 + $0xb0] sm:$0xf]
    %v81 = vld [vmem:[%s1 + $0xb4] sm:$0xf]
    %v82 = vld [vmem:[%s1 + $0xb8] sm:$0xf]
    %v83 = vld [vmem:[%s1 + $0xbc] sm:$0xf]
    %v84 = vld [vmem:[%s1 + $0xc0] sm:$0xf]
    %v85 = vld [vmem:[%s1 + $0xc4] sm:$0xf]
    %v86 = vld [vmem:[%s1 + $0xc8] sm:$0xf]
    %v87 = vld [vmem:[%s1 + $0xcc] sm:$0xf]
    %v88 = vld [vmem:[%s1 + $0xd0] sm:$0xf]
    %v89 = vld [vmem:[%s1 + $0xd4] sm:$0xf]
    %v90 = vld [vmem:[%s1 + $0xd8] sm:$0xf]
    %v91 = vld [vmem:[%s1 + $0xdc] sm:$0xf]
    %v92 = vld [vmem:[%s1 + $0xe0] sm:$0xf]
    %v93 = vld [vmem:[%s1 + $0xe4] sm:$0xf]
    %v94 = vld [vmem:[%s1 + $0xe8] sm:$0xf]
    %v95 = vld [vmem:[%s1 + $0xec] sm:$0xf]
    %v96 = vld [vmem:[%s1 + $0xf0] sm:$0xf]
    %v97 = vld [vmem:[%s1 + $0xf4] sm:$0xf]
    %v98 = vld [vmem:[%s1 + $0xf8] sm:$0xf]
    %v99 = vld [vmem:[%s1 + $0xfc] sm:$0xf]
    %v100 = vld [vmem:[%s1 + $0x100] sm:$0xf]
    %v101 = vld [vmem:[%s1 + $0x104] sm:$0xf]
    %v102 = vld [vmem:[%s1 + $0x108] sm:$0xf]
    %v103 = vld [vmem:[%s1 + $0x10c] sm:$0xf]
    %v104 = vld [vmem:[%s1 + $0x110] sm:$0xf]
    %v105 = vld [vmem:[%s1 + $0x114] sm:$0xf]
    %v106 = vld [vmem:[%s1 + $0x118] sm:$0xf]
    %v107 = vld [vmem:[%s1 + $0x11c] sm:$0xf]
    %v108 = vld [vmem:[%s1 + $0x120] sm:$0xf]
    %v109 = vld [vmem:[%s1 + $0x124] sm:$0xf]
    %v110 = vld [vmem:[%s1 + $0x128] sm:$0xf]
    %v111 = vld [vmem:[%s1 + $0x12c] sm:$0xf]
    %v112 = vld [vmem:[%s1 + $0x130] sm:$0xf]
    %v113 = vld [vmem:[%s1 + $0x134] sm:$0xf]
    %v114 = vld [vmem:[%s1 + $0x138] sm:$0xf]
    %v115 = vld [vmem:[%s1 + $0x13c] sm:$0xf]
    %v116 = vld [vmem:[%s1 + $0x140] sm:$0xf]
    %v117 = vld [vmem:[%s1 + $0x144] sm:$0xf]
    %v118 = vld [vmem:[%s1 + $0x148] sm:$0xf]
    %v119 = vld [vmem:[%s1 + $0x14c] sm:$0xf]
    %v120 = vld [vmem:[%s1 + $0x150] sm:$0xf]
    %v121 = vld [vmem:[%s1 + $0x154] sm:$0xf]
    %v122 = vld [vmem:[%s1 + $0x158] sm:$0xf]
    %v123 = vld [vmem:[%s1 + $0x15c] sm:$0xf]
    %v124 = vld [vmem:[%s1 + $0x160] sm:$0xf]
    %v125 = vld [vmem:[%s1 + $0x164] sm:$0xf]
    %v126 = vld [vmem:[%s1 + $0x168] sm:$0xf]
    %v127 = vld [vmem:[%s1 + $0x16c] sm:$0xf]
    %v128 = vld [vmem:[%s1 + $0x170] sm:$0xf]
    %v129 = vld [vmem:[%s1 + $0x174] sm:$0xf]
    %v130 = vld [vmem:[%s1 + $0x178] sm:$0xf]
    %v131 = vld [vmem:[%s1 + $0x17c] sm:$0xf]
    %v132 = vld [vmem:[%s1 + $0x180] sm:$0xf]
    %v133 = vld [vmem:[%s1 + $0x184] sm:$0xf]
    %v134 = vld [vmem:[%s2] sm:$0x1]
    %v136 = vlaneseq
    %v137 = vshrl.u32 %v136, 7
    %v138 = vsub.s32 0, %v137
    %v139 = vrot.slane %v134, %v138
    %v239 = vunpack.c.l.b16 %v36
    %v240 = vunpack.c.l.b16 %v37
    %v241 = vunpack.c.l.b16 %v38
    %v242 = vunpack.c.l.b16 %v39
    %v243 = vunpack.c.l.b16 %v40
    %v244 = vunpack.c.l.b16 %v41
    %v245 = vunpack.c.l.b16 %v42
    %v246 = vunpack.c.l.b16 %v43
    %v247 = vunpack.c.l.b16 %v44
    %v248 = vunpack.c.l.b16 %v45
    %v249 = vunpack.c.l.b16 %v46
    %v250 = vunpack.c.l.b16 %v47
    %v251 = vunpack.c.l.b16 %v48
    %v252 = vunpack.c.l.b16 %v49
    %v253 = vunpack.c.l.b16 %v50
    %v254 = vunpack.c.l.b16 %v51
    %v255 = vunpack.c.l.b16 %v52
    %v256 = vunpack.c.l.b16 %v53
    %v257 = vunpack.c.l.b16 %v54
    %v258 = vunpack.c.l.b16 %v55
    %v259 = vunpack.c.l.b16 %v56
    %v260 = vunpack.c.l.b16 %v57
    %v261 = vunpack.c.l.b16 %v58
    %v262 = vunpack.c.l.b16 %v59
    %v263 = vunpack.c.l.b16 %v60
    %v264 = vunpack.c.l.b16 %v61
    %v265 = vunpack.c.l.b16 %v62
    %v266 = vunpack.c.l.b16 %v63
    %v267 = vunpack.c.l.b16 %v64
    %v268 = vunpack.c.l.b16 %v65
    %v269 = vunpack.c.l.b16 %v66
    %v270 = vunpack.c.l.b16 %v67
    %v271 = vunpack.c.l.b16 %v68
    %v272 = vunpack.c.l.b16 %v69
    %v273 = vunpack.c.l.b16 %v70
    %v274 = vunpack.c.l.b16 %v71
    %v275 = vunpack.c.l.b16 %v72
    %v276 = vunpack.c.l.b16 %v73
    %v277 = vunpack.c.l.b16 %v74
    %v278 = vunpack.c.l.b16 %v75
    %v279 = vunpack.c.l.b16 %v76
    %v280 = vunpack.c.l.b16 %v77
    %v281 = vunpack.c.l.b16 %v78
    %v282 = vunpack.c.l.b16 %v79
    %v283 = vunpack.c.l.b16 %v80
    %v284 = vunpack.c.l.b16 %v81
    %v285 = vunpack.c.l.b16 %v82
    %v286 = vunpack.c.l.b16 %v83
    %v287 = vunpack.c.l.b16 %v84
    %v288 = vunpack.c.l.b16 %v85
    %v289 = vunpack.c.l.b16 %v86
    %v290 = vunpack.c.l.b16 %v87
    %v291 = vunpack.c.l.b16 %v88
    %v292 = vunpack.c.l.b16 %v89
    %v293 = vunpack.c.l.b16 %v90
    %v294 = vunpack.c.l.b16 %v91
    %v295 = vunpack.c.l.b16 %v92
    %v296 = vunpack.c.l.b16 %v93
    %v297 = vunpack.c.l.b16 %v94
    %v298 = vunpack.c.l.b16 %v95
    %v299 = vunpack.c.l.b16 %v96
    %v300 = vunpack.c.l.b16 %v97
    %v301 = vunpack.c.l.b16 %v98
    %v302 = vunpack.c.l.b16 %v99
    %v303 = vunpack.c.l.b16 %v100
    %v304 = vunpack.c.l.b16 %v101
    %v305 = vunpack.c.l.b16 %v102
    %v306 = vunpack.c.l.b16 %v103
    %v307 = vunpack.c.l.b16 %v104
    %v308 = vunpack.c.l.b16 %v105
    %v309 = vunpack.c.l.b16 %v106
    %v310 = vunpack.c.l.b16 %v107
    %v311 = vunpack.c.l.b16 %v108
    %v312 = vunpack.c.l.b16 %v109
    %v313 = vunpack.c.l.b16 %v110
    %v314 = vunpack.c.l.b16 %v111
    %v315 = vunpack.c.l.b16 %v112
    %v316 = vunpack.c.l.b16 %v113
    %v317 = vunpack.c.l.b16 %v114
    %v318 = vunpack.c.l.b16 %v115
    %v319 = vunpack.c.l.b16 %v116
    %v320 = vunpack.c.l.b16 %v117
    %v321 = vunpack.c.l.b16 %v118
    %v322 = vunpack.c.l.b16 %v119
    %v323 = vunpack.c.l.b16 %v120
    %v324 = vunpack.c.l.b16 %v121
    %v325 = vunpack.c.l.b16 %v122
    %v326 = vunpack.c.l.b16 %v123
    %v327 = vunpack.c.l.b16 %v124
    %v328 = vunpack.c.l.b16 %v125
    %v329 = vunpack.c.l.b16 %v126
    %v330 = vunpack.c.l.b16 %v127
    %v331 = vunpack.c.l.b16 %v128
    %v332 = vunpack.c.l.b16 %v129
    %v333 = vunpack.c.l.b16 %v130
    %v334 = vunpack.c.l.b16 %v131
    %v335 = vunpack.c.l.b16 %v132
    %v336 = vunpack.c.l.b16 %v133
    %v337 = vpack.c.b16 %v240, %v239
    %v338 = vpack.c.b16 %v242, %v241
    %v339 = vpack.c.b16 %v244, %v243
    %v340 = vpack.c.b16 %v246, %v245
    %v341 = vpack.c.b16 %v248, %v247
    %v342 = vpack.c.b16 %v250, %v249
    %v343 = vpack.c.b16 %v252, %v251
    %v344 = vpack.c.b16 %v254, %v253
    %v345 = vpack.c.b16 %v256, %v255
    %v346 = vpack.c.b16 %v258, %v257
    %v347 = vpack.c.b16 %v260, %v259
    %v348 = vpack.c.b16 %v262, %v261
    %v349 = vpack.c.b16 %v264, %v263
    %v350 = vpack.c.b16 %v266, %v265
    %v351 = vpack.c.b16 %v268, %v267
    %v352 = vpack.c.b16 %v270, %v269
    %v353 = vpack.c.b16 %v272, %v271
    %v354 = vpack.c.b16 %v274, %v273
    %v355 = vpack.c.b16 %v276, %v275
    %v356 = vpack.c.b16 %v278, %v277
    %v357 = vpack.c.b16 %v280, %v279
    %v358 = vpack.c.b16 %v282, %v281
    %v359 = vpack.c.b16 %v284, %v283
    %v360 = vpack.c.b16 %v286, %v285
    %v361 = vpack.c.b16 %v288, %v287
    %v362 = vpack.c.b16 %v290, %v289
    %v363 = vpack.c.b16 %v292, %v291
    %v364 = vpack.c.b16 %v294, %v293
    %v365 = vpack.c.b16 %v296, %v295
    %v366 = vpack.c.b16 %v298, %v297
    %v367 = vpack.c.b16 %v300, %v299
    %v368 = vpack.c.b16 %v302, %v301
    %v369 = vpack.c.b16 %v304, %v303
    %v370 = vpack.c.b16 %v306, %v305
    %v371 = vpack.c.b16 %v308, %v307
    %v372 = vpack.c.b16 %v310, %v309
    %v373 = vpack.c.b16 %v312, %v311
    %v374 = vpack.c.b16 %v314, %v313
    %v375 = vpack.c.b16 %v316, %v315
    %v376 = vpack.c.b16 %v318, %v317
    %v377 = vpack.c.b16 %v320, %v319
    %v378 = vpack.c.b16 %v322, %v321
    %v379 = vpack.c.b16 %v324, %v323
    %v380 = vpack.c.b16 %v326, %v325
    %v381 = vpack.c.b16 %v328, %v327
    %v382 = vpack.c.b16 %v330, %v329
    %v383 = vpack.c.b16 %v332, %v331
    %v384 = vpack.c.b16 %v334, %v333
    %v385 = vpack.c.b16 %v336, %v335
    %vm435 = vcmask 130048
    %v437 = vsel %vm435, %v35, 0
    %439 = vmatprep.subr.bf16.mxu0 0
    %440 = vmatpush1.bf16.msra.mxu0 %v337
    %441 = vmatprep.subr.bf16.mxu0 0
    %442 = vmatpush1.bf16.msra.mxu0 %v338
    %443 = vmatprep.subr.bf16.mxu0 0
    %444 = vmatpush1.bf16.msra.mxu0 %v339
    %445 = vmatprep.subr.bf16.mxu0 0
    %446 = vmatpush1.bf16.msra.mxu0 %v340
    %447 = vmatprep.subr.bf16.mxu0 0
    %448 = vmatpush1.bf16.msra.mxu0 %v341
    %449 = vmatprep.subr.bf16.mxu0 0
    %450 = vmatpush1.bf16.msra.mxu0 %v342
    %451 = vmatprep.subr.bf16.mxu0 0
    %452 = vmatpush1.bf16.msra.mxu0 %v343
    %453 = vmatprep.subr.bf16.mxu0 0
    %454 = vmatpush1.bf16.msra.mxu0 %v344
    %455 = vmatprep.subr.bf16.mxu0 0
    %456 = vmatpush1.bf16.msra.mxu0 %v345
    %457 = vmatprep.subr.bf16.mxu0 0
    %458 = vmatpush1.bf16.msra.mxu0 %v346
    %459 = vmatprep.subr.bf16.mxu0 0
    %460 = vmatpush1.bf16.msra.mxu0 %v347
    %461 = vmatprep.subr.bf16.mxu0 0
    %462 = vmatpush1.bf16.msra.mxu0 %v348
    %463 = vmatprep.subr.bf16.mxu0 0
    %464 = vmatpush1.bf16.msra.mxu0 %v349
    %465 = vmatprep.subr.bf16.mxu0 0
    %466 = vmatpush1.bf16.msra.mxu0 %v350
    %467 = vmatprep.subr.bf16.mxu0 0
    %468 = vmatpush1.bf16.msra.mxu0 %v351
    %469 = vmatprep.subr.bf16.mxu0 0
    %470 = vmatpush1.bf16.msra.mxu0 %v352
    %471 = vmatprep.mubr.bf16.mxu0 %v30
    %472 = vmatmul.mubr.bf16.gmra.mrb[0].mxu0 %v29
    %v473 = vpop.f32.mrb[0].mxu0
    %v474 = vadd.f32 %v139, %v473
    %v475 = vpop.f32.mrb[0].mxu0
    %v476 = vpop.f32.mrb[0].mxu0
    %v477 = vpop.f32.mrb[0].mxu0
    %478 = vdwg.mxu0
    %479 = vmatprep.subr.bf16.mxu0 0
    %480 = vmatpush1.bf16.msra.mxu0 %v353
    %481 = vmatprep.subr.bf16.mxu0 0
    %482 = vmatpush1.bf16.msra.mxu0 %v354
    %483 = vmatprep.subr.bf16.mxu0 0
    %484 = vmatpush1.bf16.msra.mxu0 %v355
    %485 = vmatprep.subr.bf16.mxu0 0
    %486 = vmatpush1.bf16.msra.mxu0 %v356
    %487 = vmatprep.subr.bf16.mxu0 0
    %488 = vmatpush1.bf16.msra.mxu0 %v357
    %489 = vmatprep.subr.bf16.mxu0 0
    %490 = vmatpush1.bf16.msra.mxu0 %v358
    %491 = vmatprep.subr.bf16.mxu0 0
    %492 = vmatpush1.bf16.msra.mxu0 %v359
    %493 = vmatprep.subr.bf16.mxu0 0
    %494 = vmatpush1.bf16.msra.mxu0 %v360
    %495 = vmatprep.subr.bf16.mxu0 0
    %496 = vmatpush1.bf16.msra.mxu0 %v361
    %497 = vmatprep.subr.bf16.mxu0 0
    %498 = vmatpush1.bf16.msra.mxu0 %v362
    %499 = vmatprep.subr.bf16.mxu0 0
    %500 = vmatpush1.bf16.msra.mxu0 %v363
    %501 = vmatprep.subr.bf16.mxu0 0
    %502 = vmatpush1.bf16.msra.mxu0 %v364
    %503 = vmatprep.subr.bf16.mxu0 0
    %504 = vmatpush1.bf16.msra.mxu0 %v365
    %505 = vmatprep.subr.bf16.mxu0 0
    %506 = vmatpush1.bf16.msra.mxu0 %v366
    %507 = vmatprep.subr.bf16.mxu0 0
    %508 = vmatpush1.bf16.msra.mxu0 %v367
    %509 = vmatprep.subr.bf16.mxu0 0
    %510 = vmatpush1.bf16.msra.mxu0 %v368
    %511 = vmatprep.mubr.bf16.mxu0 %v32
    %512 = vmatmul.mubr.bf16.gmra.mrb[0].mxu0 %v31
    %v513 = vpop.f32.mrb[0].mxu0
    %v514 = vadd.f32 %v474, %v513
    %v515 = vpop.f32.mrb[0].mxu0
    %v516 = vpop.f32.mrb[0].mxu0
    %v517 = vpop.f32.mrb[0].mxu0
    %518 = vdwg.mxu0
    %519 = vmatprep.subr.bf16.mxu0 0
    %520 = vmatpush1.bf16.msra.mxu0 %v369
    %521 = vmatprep.subr.bf16.mxu0 0
    %522 = vmatpush1.bf16.msra.mxu0 %v370
    %523 = vmatprep.subr.bf16.mxu0 0
    %524 = vmatpush1.bf16.msra.mxu0 %v371
    %525 = vmatprep.subr.bf16.mxu0 0
    %526 = vmatpush1.bf16.msra.mxu0 %v372
    %527 = vmatprep.subr.bf16.mxu0 0
    %528 = vmatpush1.bf16.msra.mxu0 %v373
    %529 = vmatprep.subr.bf16.mxu0 0
    %530 = vmatpush1.bf16.msra.mxu0 %v374
    %531 = vmatprep.subr.bf16.mxu0 0
    %532 = vmatpush1.bf16.msra.mxu0 %v375
    %533 = vmatprep.subr.bf16.mxu0 0
    %534 = vmatpush1.bf16.msra.mxu0 %v376
    %535 = vmatprep.subr.bf16.mxu0 0
    %536 = vmatpush1.bf16.msra.mxu0 %v377
    %537 = vmatprep.subr.bf16.mxu0 0
    %538 = vmatpush1.bf16.msra.mxu0 %v378
    %539 = vmatprep.subr.bf16.mxu0 0
    %540 = vmatpush1.bf16.msra.mxu0 %v379
    %541 = vmatprep.subr.bf16.mxu0 0
    %542 = vmatpush1.bf16.msra.mxu0 %v380
    %543 = vmatprep.subr.bf16.mxu0 0
    %544 = vmatpush1.bf16.msra.mxu0 %v381
    %545 = vmatprep.subr.bf16.mxu0 0
    %546 = vmatpush1.bf16.msra.mxu0 %v382
    %547 = vmatprep.subr.bf16.mxu0 0
    %548 = vmatpush1.bf16.msra.mxu0 %v383
    %549 = vmatprep.subr.bf16.mxu0 0
    %550 = vmatpush1.bf16.msra.mxu0 %v384
    %551 = vmatprep.mubr.bf16.mxu0 %v34
    %552 = vmatmul.mubr.bf16.gmra.mrb[0].mxu0 %v33
    %v553 = vpop.f32.mrb[0].mxu0
    %v554 = vadd.f32 %v514, %v553
    %v555 = vpop.f32.mrb[0].mxu0
    %v556 = vpop.f32.mrb[0].mxu0
    %v557 = vpop.f32.mrb[0].mxu0
    %558 = vdwg.mxu0
    %559 = vmatprep.subr.bf16.mxu0 0
    %560 = vmatpush1.bf16.msra.mxu0 %v385
    %561 = vmatprep.subr.bf16.mxu0 0
    %562 = vmatpush1.bf16.msra.mxu0 0
    %563 = vmatprep.subr.bf16.mxu0 0
    %564 = vmatpush1.bf16.msra.mxu0 0
    %565 = vmatprep.subr.bf16.mxu0 0
    %566 = vmatpush1.bf16.msra.mxu0 0
    %567 = vmatprep.subr.bf16.mxu0 0
    %568 = vmatpush1.bf16.msra.mxu0 0
    %569 = vmatprep.subr.bf16.mxu0 0
    %570 = vmatpush1.bf16.msra.mxu0 0
    %571 = vmatprep.subr.bf16.mxu0 0
    %572 = vmatpush1.bf16.msra.mxu0 0
    %573 = vmatprep.subr.bf16.mxu0 0
    %574 = vmatpush1.bf16.msra.mxu0 0
    %575 = vmatprep.subr.bf16.mxu0 0
    %576 = vmatpush1.bf16.msra.mxu0 0
    %577 = vmatprep.subr.bf16.mxu0 0
    %578 = vmatpush1.bf16.msra.mxu0 0
    %579 = vmatprep.subr.bf16.mxu0 0
    %580 = vmatpush1.bf16.msra.mxu0 0
    %581 = vmatprep.subr.bf16.mxu0 0
    %582 = vmatpush1.bf16.msra.mxu0 0
    %583 = vmatprep.subr.bf16.mxu0 0
    %584 = vmatpush1.bf16.msra.mxu0 0
    %585 = vmatprep.subr.bf16.mxu0 0
    %586 = vmatpush1.bf16.msra.mxu0 0
    %587 = vmatprep.subr.bf16.mxu0 0
    %588 = vmatpush1.bf16.msra.mxu0 0
    %589 = vmatprep.subr.bf16.mxu0 0
    %590 = vmatpush1.bf16.msra.mxu0 0
    %591 = vmatprep.mubr.bf16.mxu0 0
    %592 = vmatmul.mubr.bf16.gmra.mrb[0].mxu0 %v437
    %v593 = vpop.f32.mrb[0].mxu0
    %v594 = vadd.f32 %v554, %v593
    %v595 = vpop.f32.mrb[0].mxu0
    %v596 = vpop.f32.mrb[0].mxu0
    %v597 = vpop.f32.mrb[0].mxu0
    %598 = vdwg.mxu0
    %v599 = vmax.f32 %v594, 0.0
    %v600 = vld [vmem:[%s3] sm:$0xf]
    %v601 = vld [vmem:[%s3 + $0x4] sm:$0xf]
    %v602 = vld [vmem:[%s3 + $0x8] sm:$0xf]
    %v603 = vld [vmem:[%s3 + $0xc] sm:$0xf]
    %v604 = vld [vmem:[%s3 + $0x10] sm:$0xf]
    %v605 = vld [vmem:[%s3 + $0x14] sm:$0xf]
    %v606 = vld [vmem:[%s3 + $0x18] sm:$0xf]
    %v607 = vld [vmem:[%s3 + $0x1c] sm:$0xf]
    %v608 = vld [vmem:[%s3 + $0x20] sm:$0xf]
    %v609 = vld [vmem:[%s3 + $0x24] sm:$0xf]
    %v610 = vld [vmem:[%s3 + $0x28] sm:$0xf]
    %v611 = vld [vmem:[%s3 + $0x2c] sm:$0xf]
    %v612 = vld [vmem:[%s3 + $0x30] sm:$0xf]
    %v613 = vld [vmem:[%s3 + $0x34] sm:$0xf]
    %v614 = vld [vmem:[%s3 + $0x38] sm:$0xf]
    %v615 = vld [vmem:[%s3 + $0x3c] sm:$0xf]
    %v616 = vunpack.c.l.bf16 %v600
    %v617 = vunpack.c.l.bf16 %v601
    %v618 = vunpack.c.l.bf16 %v602
    %v619 = vunpack.c.l.bf16 %v603
    %v620 = vunpack.c.l.bf16 %v604
    %v621 = vunpack.c.l.bf16 %v605
    %v622 = vunpack.c.l.bf16 %v606
    %v623 = vunpack.c.l.bf16 %v607
    %v624 = vunpack.c.l.bf16 %v608
    %v625 = vunpack.c.l.bf16 %v609
    %v626 = vunpack.c.l.bf16 %v610
    %v627 = vunpack.c.l.bf16 %v611
    %v628 = vunpack.c.l.bf16 %v612
    %v629 = vunpack.c.l.bf16 %v613
    %v630 = vunpack.c.l.bf16 %v614
    %v631 = vunpack.c.l.bf16 %v615
    %v632 = vld [vmem:[%s4] sm:$0x1]
    %v634 = vlaneseq
    %v635 = vshrl.u32 %v634, 7
    %v636 = vsub.s32 0, %v635
    %v637 = vrot.slane %v632, %v636
    %639 = vmatprep.subr.mxu0 0.0
    %640 = vmatpush1.msra.mxu0 %v616
    %641 = vmatprep.subr.mxu0 0.0
    %642 = vmatpush1.msra.mxu0 %v617
    %643 = vmatprep.subr.mxu0 0.0
    %644 = vmatpush1.msra.mxu0 %v618
    %645 = vmatprep.subr.mxu0 0.0
    %646 = vmatpush1.msra.mxu0 %v619
    %647 = vmatprep.subr.mxu0 0.0
    %648 = vmatpush1.msra.mxu0 %v620
    %649 = vmatprep.subr.mxu0 0.0
    %650 = vmatpush1.msra.mxu0 %v621
    %651 = vmatprep.subr.mxu0 0.0
    %652 = vmatpush1.msra.mxu0 %v622
    %653 = vmatprep.subr.mxu0 0.0
    %654 = vmatpush1.msra.mxu0 %v623
    %655 = vmatprep.subr.mxu0 0.0
    %656 = vmatpush1.msra.mxu0 %v624
    %657 = vmatprep.subr.mxu0 0.0
    %658 = vmatpush1.msra.mxu0 %v625
    %659 = vmatprep.subr.mxu0 0.0
    %660 = vmatpush1.msra.mxu0 %v626
    %661 = vmatprep.subr.mxu0 0.0
    %662 = vmatpush1.msra.mxu0 %v627
    %663 = vmatprep.subr.mxu0 0.0
    %664 = vmatpush1.msra.mxu0 %v628
    %665 = vmatprep.subr.mxu0 0.0
    %666 = vmatpush1.msra.mxu0 %v629
    %667 = vmatprep.subr.mxu0 0.0
    %668 = vmatpush1.msra.mxu0 %v630
    %669 = vmatprep.subr.mxu0 0.0
    %670 = vmatpush1.msra.mxu0 %v631
    %671 = vmatprep.subr.mxu0 0.0
    %672 = vmatpush1.msra.mxu0 0.0
    %673 = vmatprep.subr.mxu0 0.0
    %674 = vmatpush1.msra.mxu0 0.0
    %675 = vmatprep.subr.mxu0 0.0
    %676 = vmatpush1.msra.mxu0 0.0
    %677 = vmatprep.subr.mxu0 0.0
    %678 = vmatpush1.msra.mxu0 0.0
    %679 = vmatprep.subr.mxu0 0.0
    %680 = vmatpush1.msra.mxu0 0.0
    %681 = vmatprep.subr.mxu0 0.0
    %682 = vmatpush1.msra.mxu0 0.0
    %683 = vmatprep.subr.mxu0 0.0
    %684 = vmatpush1.msra.mxu0 0.0
    %685 = vmatprep.subr.mxu0 0.0
    %686 = vmatpush1.msra.mxu0 0.0
    %687 = vmatprep.subr.mxu0 0.0
    %688 = vmatpush1.msra.mxu0 0.0
    %689 = vmatprep.subr.mxu0 0.0
    %690 = vmatpush1.msra.mxu0 0.0
    %691 = vmatprep.subr.mxu0 0.0
    %692 = vmatpush1.msra.mxu0 0.0
    %693 = vmatprep.subr.mxu0 0.0
    %694 = vmatpush1.msra.mxu0 0.0
    %695 = vmatprep.subr.mxu0 0.0
    %696 = vmatpush1.msra.mxu0 0.0
    %697 = vmatprep.subr.mxu0 0.0
    %698 = vmatpush1.msra.mxu0 0.0
    %699 = vmatprep.subr.mxu0 0.0
    %700 = vmatpush1.msra.mxu0 0.0
    %701 = vmatprep.subr.mxu0 0.0
    %702 = vmatpush1.msra.mxu0 0.0
    %703 = vmatprep.mubr.f32.mxu0 0.0
    %704 = vmatmul.mubr.f32.gmra.mrb[0].mxu0 %v599
    %v705 = vpop.f32.mrb[0].mxu0
    %v706 = vadd.f32 %v637, %v705
    %v707 = vpop.f32.mrb[0].mxu0
    %708 = vdwg.mxu0
    %vm709 = vcmask 80896
    %v710 = vsel %vm709, %v706, -inf
    %711 = vmax.xlane.f32.xlu0 %v710
    %v712 = vpop.xlane.xlu0 %711
    %v713 = vsub.f32 %v706, %v712
    %v714 = vmul.f32 %v713, 1.442695
    %v715 = vpow.pop %v714
    %v716 = vsel %vm709, %v715, 0.0
    %717 = vadd.xlane.f32.xlu0 %v716
    %v718 = vpop.xlane.xlu0 %717
    %v719 = vrcp.pop %v718
    %v720 = vmul.f32 %v715, %v719
    %721 = vst.msk [vmem:[#allocation2] sm:$0xff] %vm709, %v720
    // Predicated region
    $region22: #{mnist_forward_pallas.1} parent=1 // pred_check
      _
    $region23: #{mnist_forward_pallas.1} parent=1 // pred_check_branch
      %723 = sbr.rel (0) target = $region25
    $region24: #{mnist_forward_pallas.1} parent=1 // pred_region
      %s725 = ssub.s32 128, 128
      %726 = vsyncadd [#allocation3], %s725
      %s728 = sshll.u32 [#allocation2], 4
      %s729 = int_to_ptr.vmem [resolvable:$true] %s728
      %731 = dma.vmem_to_hbm [thread:$0]  %s729, 128, %s5, [#allocation3]
    $region25: #{mnist_forward_pallas.1} parent=1 // pred_fallthru
      _
    // Predicated region
    $region26: #{mnist_forward_pallas.1} parent=1 // pred_check
      _
    $region27: #{mnist_forward_pallas.1} parent=1 // pred_check_branch
      %733 = sbr.rel (0) target = $region29
    $region28: #{mnist_forward_pallas.1} parent=1 // pred_region
      %734 = dma.done [#allocation3], 128
    $region29: #{mnist_forward_pallas.1} parent=1 // pred_fallthru
      _
    %735 = vsyncpa [#allocation3], 1

</llo_original>
